<compile_context>
chip_gen: v7x
topology: tpu7x:2x2x1
jax: 0.10.0
libtpu: 0.0.40
codegen_flags: <defaults>
</compile_context>

<pallas_src>
import jax
import jax.numpy as jnp
from jax.experimental import pallas as pl
from jax.experimental.pallas import tpu as pltpu

HIDDEN = 100   # hidden_layer_2 in the PyTorch module
PAD = 128      # lane-aligned padded hidden width


# ----------------------------------------------------------------------------
# Kernel: GRU step (h0 = 0) + folded fc2∘fc3 on one (TB, ·) batch tile.
# ----------------------------------------------------------------------------
def critic_kernel(xa_ref, wg_ref, vh_ref, vfin_ref, b_ref, out_ref):
    xa = xa_ref[...]                                    # (TB, S+A)  bf16

    # fused GRU gate matmul: one MXU push for r|z|n, each padded to 128 lanes
    # (action rows of wg are zero, so the GRU only sees the state features).
    gates = jnp.dot(xa, wg_ref[...],
                    preferred_element_type=jnp.float32)  # (TB, 384) f32

    br = b_ref[0:1, :]                                  # b_ir + b_hr   (1, 128)
    bz = b_ref[1:2, :]                                  # b_iz + b_hz
    bin_ = b_ref[2:3, :]                                # b_in
    bhn = b_ref[3:4, :]                                 # b_hn

    # transcendentals in f32 (no bf16 EUP path on v5e)
    r = jax.nn.sigmoid(gates[:, 0 * PAD:1 * PAD] + br)
    z = jax.nn.sigmoid(gates[:, 1 * PAD:2 * PAD] + bz)
    n = jnp.tanh(gates[:, 2 * PAD:3 * PAD] + bin_ + r * bhn)
    h = (1.0 - z) * n                                   # (TB, 128); lanes 100:128 == 0

    # folded fc2∘fc3:  out = h·vh + xa·vfin + c.
    # Both dots contract on the LAST dims so the result lands lane-dense as a
    # (·, TB) row -> full-width unmasked output stores.
    dn = (((1,), (1,)), ((), ()))
    oh = jax.lax.dot_general(vh_ref[...], h.astype(jnp.bfloat16), dn,
                             preferred_element_type=jnp.float32)   # (8, TB)
    oa = jax.lax.dot_general(vfin_ref[...], xa, dn,
                             preferred_element_type=jnp.float32)   # (8, TB)
    out_ref[...] = oh[0:1, :] + oa[0:1, :] + b_ref[4:5, 0:1]       # (1, TB)


# ----------------------------------------------------------------------------
# Parameter init (deterministic, mimics PyTorch default uniform(-k, k) init)
# ----------------------------------------------------------------------------
def init_params(key, state_size, action_size, hidden=HIDDEN):
    ks = jax.random.split(key, 8)
    kg = 1.0 / jnp.sqrt(hidden)
    w_ih = jax.random.uniform(ks[0], (3 * hidden, state_size), jnp.float32, -kg, kg)
    # w_hh exists in the PyTorch module but is mathematically inert (h0=0, seq=1)
    w_hh = jax.random.uniform(ks[1], (3 * hidden, hidden), jnp.float32, -kg, kg)
    b_ih = jax.random.uniform(ks[2], (3 * hidden,), jnp.float32, -kg, kg)
    b_hh = jax.random.uniform(ks[3], (3 * hidden,), jnp.float32, -kg, kg)
    k2 = 1.0 / jnp.sqrt(hidden + action_size)
    w2 = jax.random.uniform(ks[4], (hidden, hidden + action_size), jnp.float32, -k2, k2)
    b2 = jax.random.uniform(ks[5], (hidden,), jnp.float32, -k2, k2)
    k3 = 1.0 / jnp.sqrt(hidden)
    w3 = jax.random.uniform(ks[6], (1, hidden), jnp.float32, -k3, k3)
    b3 = jax.random.uniform(ks[7], (1,), jnp.float32, -k3, k3)
    return dict(w_ih=w_ih, w_hh=w_hh, b_ih=b_ih, b_hh=b_hh,
                w2=w2, b2=b2, w3=w3, b3=b3)


# ----------------------------------------------------------------------------
# One-time weight packing (hoisted out of the hot path).
# Invariants: every padded row/column is exactly zero, so the padded lanes of
# h stay exactly zero and the fold reproduces the concat([h, a]) semantics.
# ----------------------------------------------------------------------------
def prepare_params(params, hidden=HIDDEN, pad=PAD):
    H = hidden
    w_ih, b_ih, b_hh = params["w_ih"], params["b_ih"], params["b_hh"]
    w2, b2, w3, b3 = params["w2"], params["b2"], params["w3"], params["b3"]
    S = w_ih.shape[1]
    A = w2.shape[1] - H
    KA = S + A

    # fused GRU input weights: gate order r|z|n, each zero-padded to 128 lanes;
    # rows S:S+A (the action slots of the concatenated input) are zero.
    wg = jnp.zeros((KA, 3 * pad), jnp.float32)
    wg = wg.at[:S, 0 * pad:0 * pad + H].set(w_ih[:H].T)
    wg = wg.at[:S, 1 * pad:1 * pad + H].set(w_ih[H:2 * H].T)
    wg = wg.at[:S, 2 * pad:2 * pad + H].set(w_ih[2 * H:].T)

    # fc2 -> fc3 fold (valid because there is no nonlinearity between them):
    #   out = concat([h, a]) @ (w3 @ w2).T + (w3 @ b2 + b3)
    u = (w3 @ w2)[0]                       # (H + A,), computed in f32
    c = (w3 @ b2)[0] + b3[0]

    # 8-sublane slabs (row 0 carries the data, rows 1..7 are zero) so the final
    # dot_generals use well-formed (8, K) operands.
    vh = jnp.zeros((8, pad), jnp.float32).at[0, :H].set(u[:H])
    vfin = jnp.zeros((8, KA), jnp.float32).at[0, S:].set(u[H:])

    # GRU biases + folded scalar packed into one (8, 128) f32 slab
    bias = jnp.zeros((8, pad), jnp.float32)
    bias = bias.at[0, :H].set(b_ih[:H] + b_hh[:H])            # r
    bias = bias.at[1, :H].set(b_ih[H:2 * H] + b_hh[H:2 * H])  # z
    bias = bias.at[2, :H].set(b_ih[2 * H:])                   # b_in
    bias = bias.at[3, :H].set(b_hh[2 * H:])                   # b_hn
    bias = bias.at[4, 0].set(c)                               # folded fc2/fc3 bias

    return dict(wg=wg.astype(jnp.bfloat16),
                vh=vh.astype(jnp.bfloat16),
                vfin=vfin.astype(jnp.bfloat16),
                bias=bias,
                S=int(S), A=int(A))


# ----------------------------------------------------------------------------
# Batch tile selection: multiple of 8, <= 2048 rows, >= 2 grid steps for large
# batches (both v7x TensorCores), f32 temporaries stay far under scoped VMEM.
# ----------------------------------------------------------------------------
def _pick_batch_tile(b):
    b8 = ((b + 7) // 8) * 8
    if b8 <= 1024:
        return b8                                   # single tile
    half = (((b8 + 1) // 2) + 7) // 8 * 8
    return min(2048, half)


# ----------------------------------------------------------------------------
# Wrapper: mirrors the PyTorch reshape logic, tiles the batch, calls pallas_call
# ----------------------------------------------------------------------------
def critic_forward(prep, state, action):
    # --- reshape plumbing exactly as in the PyTorch forward ---
    if state.ndim == 1:
        state = state.reshape(1, 1, state.shape[-1])
    else:
        state = state.reshape(1, state.shape[-2], state.shape[-1])
    if action.ndim > 3:
        action = action.reshape(1, action.shape[0], action.shape[-1])
    state = state.astype(jnp.float32)

    B, S = state.shape[1], state.shape[2]
    A = prep["A"]
    assert S == prep["S"], f"state feature size {S} != prepared {prep['S']}"
    assert action.size == B * A, \
        f"action batch/feature mismatch: {action.shape} vs batch={B}, A={A}"
    KA = S + A

    # single batch-walking operand: [state | action] in bf16
    xa = jnp.concatenate(
        [state[0].astype(jnp.bfloat16), action.reshape(B, A).astype(jnp.bfloat16)],
        axis=1)                                               # (B, S+A)

    TB = _pick_batch_tile(B)
    Bp = pl.cdiv(B, TB) * TB
    if Bp != B:
        xa = jnp.pad(xa, ((0, Bp - B), (0, 0)))
    n_tiles = Bp // TB

    batch_map = lambda i: (i, 0)     # activations/output walk the batch grid
    res_map = lambda i: (0, 0)       # weights resident across grid steps

    out = pl.pallas_call(
        critic_kernel,
        out_shape=jax.ShapeDtypeStruct((n_tiles, TB), jnp.float32),
        grid=(n_tiles,),
        in_specs=[
            pl.BlockSpec((TB, KA), batch_map),        # [state | action]
            pl.BlockSpec((KA, 3 * PAD), res_map),     # fused GRU gate weights
            pl.BlockSpec((8, PAD), res_map),          # folded fc weights for h
            pl.BlockSpec((8, KA), res_map),           # folded fc weights for [x|a]
            pl.BlockSpec((8, PAD), res_map),          # packed bias slab
        ],
        out_specs=pl.BlockSpec((1, TB), batch_map),   # lane-dense output rows
        compiler_params=pltpu.CompilerParams(
            dimension_semantics=("parallel",)),       # megacore on v7x
    )(xa, prep["wg"], prep["vh"], prep["vfin"], prep["bias"])

    return out.reshape(Bp)[:B].reshape(1, B, 1)


# ----------------------------------------------------------------------------
# Pure-JAX f32 reference (mirrors torch.nn.GRU / Linear math) for verification
# ----------------------------------------------------------------------------
def critic_ref(params, state, action, hidden=HIDDEN):
    if state.ndim == 1:
        state = state.reshape(1, 1, state.shape[-1])
    else:
        state = state.reshape(1, state.shape[-2], state.shape[-1])
    if action.ndim > 3:
        action = action.reshape(1, action.shape[0], action.shape[-1])
    state = state.astype(jnp.float32)
    H = hidden
    x = state[0]
    a = action.reshape(x.shape[0], -1).astype(jnp.float32)

    w_ih, b_ih, b_hh = params["w_ih"], params["b_ih"], params["b_hh"]
    gi = x @ w_ih.T + b_ih
    r = jax.nn.sigmoid(gi[:, :H] + b_hh[:H])
    z = jax.nn.sigmoid(gi[:, H:2 * H] + b_hh[H:2 * H])
    n = jnp.tanh(gi[:, 2 * H:] + r * b_hh[2 * H:])
    h = (1.0 - z) * n
    net = jnp.concatenate([h, a], axis=1) @ params["w2"].T + params["b2"]
    net = net @ params["w3"].T + params["b3"]
    return net.reshape(1, -1, 1)


if __name__ == "__main__":
    key = jax.random.PRNGKey(0)
    kp, ks1, ka1, ks2, ka2 = jax.random.split(key, 5)

    state_size, action_size = 8, 4
    params = init_params(kp, state_size, action_size)
    prep = prepare_params(params)       # one-time packing, outside the hot path

    ok = True
    for batch, kS, kA in [(8, ks1, ka1), (37, ks2, ka2)]:
        # state (B, state_size): forward() reshapes it to (seq=1, B, state_size)
        state = jax.random.normal(kS, (batch, state_size), jnp.float32)
        # action already (1, B, action_size) as the forward expects for concat
        action = jax.random.normal(kA, (1, batch, action_size), jnp.float32)

        out = jax.block_until_ready(critic_forward(prep, state, action))
        ref = critic_ref(params, state, action)

        assert out.shape == (1, batch, 1), out.shape
        err = float(jnp.max(jnp.abs(out - ref)))
        # bf16 matmul operands -> loose-ish but bug-detecting tolerance
        assert err < 2e-2, f"batch={batch}: max abs err {err}"
        ok = ok and err < 2e-2

    if ok:
        print("KERNEL_OK")
</pallas_src>

<mosaic_0001>
module attributes {stable_mosaic.version = 11 : i64} {
  func.func @critic_kernel(%arg0: i32, %arg1: memref<8x12xbf16, #tpu.memory_space<vmem>>, %arg2: memref<12x384xbf16, #tpu.memory_space<vmem>>, %arg3: memref<8x128xbf16, #tpu.memory_space<vmem>>, %arg4: memref<8x12xbf16, #tpu.memory_space<vmem>>, %arg5: memref<8x128xf32, #tpu.memory_space<vmem>>, %arg6: memref<1x8xf32, #tpu.memory_space<vmem>>) attributes {dimension_semantics = [#tpu.dimension_semantics<parallel>], iteration_bounds = array<i64: 1>, scalar_prefetch = 0 : i64, scratch_operands = 0 : i64, tpu.core_type = #tpu.core_type<tc>, window_params = [{transform_indices = @transform_0, window_bounds = array<i64: 8, 12>}, {pipeline_mode = #tpu.pipeline_mode<synchronous>, transform_indices = @transform_1, window_bounds = array<i64: 12, 384>}, {pipeline_mode = #tpu.pipeline_mode<synchronous>, transform_indices = @transform_2, window_bounds = array<i64: 8, 128>}, {pipeline_mode = #tpu.pipeline_mode<synchronous>, transform_indices = @transform_3, window_bounds = array<i64: 8, 12>}, {pipeline_mode = #tpu.pipeline_mode<synchronous>, transform_indices = @transform_4, window_bounds = array<i64: 8, 128>}, {transform_indices = @transform_5, window_bounds = array<i64: 1, 8>}]} {
    %c0 = arith.constant 0 : index
    %c0_0 = arith.constant 0 : index
    %0 = vector.load %arg1[%c0, %c0_0] : memref<8x12xbf16, #tpu.memory_space<vmem>>, vector<8x12xbf16>
    %c0_1 = arith.constant 0 : index
    %c0_2 = arith.constant 0 : index
    %1 = vector.load %arg2[%c0_1, %c0_2] : memref<12x384xbf16, #tpu.memory_space<vmem>>, vector<12x384xbf16>
    %cst = arith.constant dense<0.000000e+00> : vector<8x384xf32>
    %2 = tpu.matmul %0, %1, %cst {dimension_numbers = #tpu.dot_dimension_numbers<[1], [0], [0], [1], [0, 0, 1, 1], [], []>} : vector<8x12xbf16>, vector<12x384xbf16>, vector<8x384xf32> -> vector<8x384xf32>
    %c0_3 = arith.constant 0 : index
    %c0_4 = arith.constant 0 : index
    %3 = vector.load %arg5[%c0_3, %c0_4] : memref<8x128xf32, #tpu.memory_space<vmem>>, vector<1x128xf32>
    %c1 = arith.constant 1 : index
    %c0_5 = arith.constant 0 : index
    %4 = vector.load %arg5[%c1, %c0_5] : memref<8x128xf32, #tpu.memory_space<vmem>>, vector<1x128xf32>
    %c2 = arith.constant 2 : index
    %c0_6 = arith.constant 0 : index
    %5 = vector.load %arg5[%c2, %c0_6] : memref<8x128xf32, #tpu.memory_space<vmem>>, vector<1x128xf32>
    %c3 = arith.constant 3 : index
    %c0_7 = arith.constant 0 : index
    %6 = vector.load %arg5[%c3, %c0_7] : memref<8x128xf32, #tpu.memory_space<vmem>>, vector<1x128xf32>
    %7 = vector.extract_strided_slice %2 {offsets = [0, 0], sizes = [8, 128], strides = [1, 1]} : vector<8x384xf32> to vector<8x128xf32>
    %8 = vector.broadcast %3 : vector<1x128xf32> to vector<8x128xf32>
    %9 = arith.addf %7, %8 : vector<8x128xf32>
    %10 = arith.negf %9 : vector<8x128xf32>
    %11 = math.exp %10 : vector<8x128xf32>
    %cst_8 = arith.constant 1.000000e+00 : f32
    %12 = vector.broadcast %cst_8 : f32 to vector<8x128xf32>
    %13 = arith.addf %12, %11 : vector<8x128xf32>
    %14 = arith.divf %12, %13 : vector<8x128xf32>
    %15 = vector.extract_strided_slice %2 {offsets = [0, 128], sizes = [8, 128], strides = [1, 1]} : vector<8x384xf32> to vector<8x128xf32>
    %16 = vector.broadcast %4 : vector<1x128xf32> to vector<8x128xf32>
    %17 = arith.addf %15, %16 : vector<8x128xf32>
    %18 = arith.negf %17 : vector<8x128xf32>
    %19 = math.exp %18 : vector<8x128xf32>
    %cst_9 = arith.constant 1.000000e+00 : f32
    %20 = vector.broadcast %cst_9 : f32 to vector<8x128xf32>
    %21 = arith.addf %20, %19 : vector<8x128xf32>
    %22 = arith.divf %20, %21 : vector<8x128xf32>
    %23 = vector.extract_strided_slice %2 {offsets = [0, 256], sizes = [8, 128], strides = [1, 1]} : vector<8x384xf32> to vector<8x128xf32>
    %24 = vector.broadcast %5 : vector<1x128xf32> to vector<8x128xf32>
    %25 = arith.addf %23, %24 : vector<8x128xf32>
    %26 = vector.broadcast %6 : vector<1x128xf32> to vector<8x128xf32>
    %27 = arith.mulf %14, %26 : vector<8x128xf32>
    %28 = arith.addf %25, %27 : vector<8x128xf32>
    %29 = math.tanh %28 : vector<8x128xf32>
    %cst_10 = arith.constant 1.000000e+00 : f32
    %30 = vector.broadcast %cst_10 : f32 to vector<8x128xf32>
    %31 = arith.subf %30, %22 : vector<8x128xf32>
    %32 = arith.mulf %31, %29 : vector<8x128xf32>
    %c0_11 = arith.constant 0 : index
    %c0_12 = arith.constant 0 : index
    %33 = vector.load %arg3[%c0_11, %c0_12] : memref<8x128xbf16, #tpu.memory_space<vmem>>, vector<8x128xbf16>
    %34 = arith.truncf %32 : vector<8x128xf32> to vector<8x128xbf16>
    %cst_13 = arith.constant dense<0.000000e+00> : vector<8x8xf32>
    %35 = tpu.matmul %33, %34, %cst_13 {dimension_numbers = #tpu.dot_dimension_numbers<[1], [1], [0], [0], [0, 0, 1, 0], [], []>} : vector<8x128xbf16>, vector<8x128xbf16>, vector<8x8xf32> -> vector<8x8xf32>
    %c0_14 = arith.constant 0 : index
    %c0_15 = arith.constant 0 : index
    %36 = vector.load %arg4[%c0_14, %c0_15] : memref<8x12xbf16, #tpu.memory_space<vmem>>, vector<8x12xbf16>
    %cst_16 = arith.constant dense<0.000000e+00> : vector<8x8xf32>
    %37 = tpu.matmul %36, %0, %cst_16 {dimension_numbers = #tpu.dot_dimension_numbers<[1], [1], [0], [0], [0, 0, 1, 0], [], []>} : vector<8x12xbf16>, vector<8x12xbf16>, vector<8x8xf32> -> vector<8x8xf32>
    %38 = vector.extract_strided_slice %35 {offsets = [0, 0], sizes = [1, 8], strides = [1, 1]} : vector<8x8xf32> to vector<1x8xf32>
    %39 = vector.extract_strided_slice %37 {offsets = [0, 0], sizes = [1, 8], strides = [1, 1]} : vector<8x8xf32> to vector<1x8xf32>
    %40 = arith.addf %38, %39 : vector<1x8xf32>
    %c4 = arith.constant 4 : index
    %c0_17 = arith.constant 0 : index
    %41 = vector.load %arg5[%c4, %c0_17] : memref<8x128xf32, #tpu.memory_space<vmem>>, vector<1x1xf32>
    %42 = vector.broadcast %41 : vector<1x1xf32> to vector<1x8xf32>
    %43 = arith.addf %40, %42 : vector<1x8xf32>
    %c0_18 = arith.constant 0 : index
    %c0_19 = arith.constant 0 : index
    %44 = vector.load %arg6[%c0_18, %c0_19] : memref<1x8xf32, #tpu.memory_space<vmem>>, vector<1x8xf32>
    tpu.vector_store %arg6[%c0_18, %c0_19], %43 {strides = array<i32>} : memref<1x8xf32, #tpu.memory_space<vmem>>, vector<1x8xf32>,
    return
  }
  func.func @transform_0(%arg0: i32) -> (i32, i32) {
    %c0_i32 = arith.constant 0 : i32
    %c0_i32_0 = arith.constant 0 : i32
    return %arg0, %c0_i32 : i32, i32
  }
  func.func @transform_1(%arg0: i32) -> (i32, i32) {
    %c0_i32 = arith.constant 0 : i32
    %c0_i32_0 = arith.constant 0 : i32
    %c0_i32_1 = arith.constant 0 : i32
    return %c0_i32, %c0_i32_0 : i32, i32
  }
  func.func @transform_2(%arg0: i32) -> (i32, i32) {
    %c0_i32 = arith.constant 0 : i32
    %c0_i32_0 = arith.constant 0 : i32
    %c0_i32_1 = arith.constant 0 : i32
    return %c0_i32, %c0_i32_0 : i32, i32
  }
  func.func @transform_3(%arg0: i32) -> (i32, i32) {
    %c0_i32 = arith.constant 0 : i32
    %c0_i32_0 = arith.constant 0 : i32
    %c0_i32_1 = arith.constant 0 : i32
    return %c0_i32, %c0_i32_0 : i32, i32
  }
  func.func @transform_4(%arg0: i32) -> (i32, i32) {
    %c0_i32 = arith.constant 0 : i32
    %c0_i32_0 = arith.constant 0 : i32
    %c0_i32_1 = arith.constant 0 : i32
    return %c0_i32, %c0_i32_0 : i32, i32
  }
  func.func @transform_5(%arg0: i32) -> (i32, i32) {
    %c0_i32 = arith.constant 0 : i32
    %c0_i32_0 = arith.constant 0 : i32
    return %arg0, %c0_i32 : i32, i32
  }
}

</mosaic_0001>

<llo_original>
// kernel: tpu_custom_call.1
$region0: #{tpu_custom_call.1}
  #allocation0 [shape = 'u32[]', space=smem, size = 0x4, offset = 0x4, fixed_abs, tag = 'smem constant byte address 0x4 - core index']
  #allocation1 [shape = 'u32[144,128]{1,0:T(1,128)}', space=vmem, size = 0x12000, scoped, tag = 'internal scratch']
  %s0 = inlined_call_operand.hbm [shape: bf16[8,12], index: 0, kind: input, shape index: {}]
  %s1 = inlined_call_operand.hbm [shape: bf16[12,384], index: 1, kind: input, shape index: {}]
  %s2 = inlined_call_operand.vmem [shape: bf16[8,128], index: 2, kind: input, shape index: {}]
  %s3 = inlined_call_operand.hbm [shape: bf16[8,12], index: 3, kind: input, shape index: {}]
  %s4 = inlined_call_operand.vmem [shape: f32[8,128], index: 4, kind: input, shape index: {}]
  %s5 = inlined_call_operand.hbm [shape: f32[1,8], index: 5, kind: output, shape index: {}]
  %s6 = sld [smem:[#allocation0]]
  $region42: #{tpu_custom_call.1} parent=0
    _
  %s8 = ssub.s32 1, %s6
  %s9 = scalar_select 0, %s8, %s6
  $region1: #{tpu_custom_call.1} parent=0
    #allocation2 [shape = 'u8[2048]{0}', space=vmem, size = 0x800, scoped, tag = 'input window, operand 0, single buffered']
    #allocation3 [shape = 's32[1]{0}', space=sflag, size = 0x4, scoped, tag = 'scoped memory for tpu_custom_call.1']
    #allocation4 [shape = 's32[1]{0}', space=sflag, size = 0x4, scoped, tag = 'scoped memory for tpu_custom_call.1']
    #allocation5 [shape = 'u8[12288]{0}', space=vmem, size = 0x3000, scoped, tag = 'input window, operand 1, single buffered']
    #allocation6 [shape = 's32[1]{0}', space=sflag, size = 0x4, scoped, tag = 'scoped memory for tpu_custom_call.1']
    #allocation7 [shape = 'u8[2048]{0}', space=vmem, size = 0x800, scoped, tag = 'input window, operand 3, single buffered']
    #allocation8 [shape = 'u8[512]{0}', space=vmem, size = 0x400, scoped, tag = 'output window, operand 0, single buffered']
    %10 = vsyncpa [#allocation3], 0
    %11 = vsyncpa [#allocation6], 0
    %12 = vsyncpa [#allocation4], 0
    // Predicated region
    $region2: #{tpu_custom_call.1} parent=1 // pred_check
      _
    $region3: #{tpu_custom_call.1} parent=1 // pred_check_branch
      %14 = sbr.rel (0) target = $region5
    $region4: #{tpu_custom_call.1} parent=1 // pred_region
      %s16 = ssub.s32 64, 64
      %17 = vsyncadd [#allocation3], %s16
      %s19 = sshll.u32 [#allocation2], 4
      %s20 = int_to_ptr.vmem [resolvable:$true] %s19
      %22 = dma.hbm_to_vmem [thread:$0]  %s0, 64, %s20, [#allocation3]
    $region5: #{tpu_custom_call.1} parent=1 // pred_fallthru
      _
    // Predicated region
    $region6: #{tpu_custom_call.1} parent=1 // pred_check
      _
    $region7: #{tpu_custom_call.1} parent=1 // pred_check_branch
      %24 = sbr.rel (0) target = $region9
    $region8: #{tpu_custom_call.1} parent=1 // pred_region
      %s26 = ssub.s32 384, 384
      %27 = vsyncadd [#allocation6], %s26
      %s28 = sshll.u32 [#allocation5], 4
      %s29 = int_to_ptr.vmem [resolvable:$true] %s28
      %34 = dma.hbm_to_vmem [thread:$0]  %s1, 384, %s29, [#allocation6], 192, 192, 12
    $region9: #{tpu_custom_call.1} parent=1 // pred_fallthru
      _
    // Predicated region
    $region10: #{tpu_custom_call.1} parent=1 // pred_check
      _
    $region11: #{tpu_custom_call.1} parent=1 // pred_check_branch
      %36 = sbr.rel (0) target = $region13
    $region12: #{tpu_custom_call.1} parent=1 // pred_region
      _
    $region13: #{tpu_custom_call.1} parent=1 // pred_fallthru
      _
    // Predicated region
    $region14: #{tpu_custom_call.1} parent=1 // pred_check
      _
    $region15: #{tpu_custom_call.1} parent=1 // pred_check_branch
      %38 = sbr.rel (0) target = $region17
    $region16: #{tpu_custom_call.1} parent=1 // pred_region
      %s40 = ssub.s32 64, 64
      %41 = vsyncadd [#allocation6], %s40
      %s43 = sshll.u32 [#allocation7], 4
      %s44 = int_to_ptr.vmem [resolvable:$true] %s43
      %46 = dma.hbm_to_vmem [thread:$0]  %s3, 64, %s44, [#allocation6]
    $region17: #{tpu_custom_call.1} parent=1 // pred_fallthru
      _
    // Predicated region
    $region18: #{tpu_custom_call.1} parent=1 // pred_check
      _
    $region19: #{tpu_custom_call.1} parent=1 // pred_check_branch
      %48 = sbr.rel (0) target = $region21
    $region20: #{tpu_custom_call.1} parent=1 // pred_region
      _
    $region21: #{tpu_custom_call.1} parent=1 // pred_fallthru
      _
    // Predicated region
    $region22: #{tpu_custom_call.1} parent=1 // pred_check
      _
    $region23: #{tpu_custom_call.1} parent=1 // pred_check_branch
      %50 = sbr.rel (0) target = $region25
    $region24: #{tpu_custom_call.1} parent=1 // pred_region
      %51 = dma.done [#allocation3], 64
    $region25: #{tpu_custom_call.1} parent=1 // pred_fallthru
      _
    // Predicated region
    $region26: #{tpu_custom_call.1} parent=1 // pred_check
      _
    $region27: #{tpu_custom_call.1} parent=1 // pred_check_branch
      %53 = sbr.rel (0) target = $region29
    $region28: #{tpu_custom_call.1} parent=1 // pred_region
      %54 = dma.done [#allocation6], 384
    $region29: #{tpu_custom_call.1} parent=1 // pred_fallthru
      _
    // Predicated region
    $region30: #{tpu_custom_call.1} parent=1 // pred_check
      _
    $region31: #{tpu_custom_call.1} parent=1 // pred_check_branch
      %56 = sbr.rel (0) target = $region33
    $region32: #{tpu_custom_call.1} parent=1 // pred_region
      %57 = dma.done [#allocation6], 64
    $region33: #{tpu_custom_call.1} parent=1 // pred_fallthru
      _
    %v59 = vld [vmem:[#allocation2] sm:$0xf]
    %v60 = vld [vmem:[#allocation5] sm:$0xff]
    %v61 = vld [vmem:[#allocation5 + $0x8] sm:$0xf]
    %v62 = vld [vmem:[#allocation5 + $0xc] sm:$0x33]
    %v63 = vld [vmem:[#allocation5 + $0x14] sm:$0x3]
    %v68 = vunpack.c.l.b16 %v60
    %v69 = vunpack.c.h.b16 %v60
    %v70 = vunpack.c.l.b16 %v61
    %v71 = vunpack.c.l.b16 %v62
    %v72 = vunpack.c.h.b16 %v62
    %v73 = vunpack.c.l.b16 %v63
    %v74 = vpack.c.b16 %v71, %v68
    %v75 = vpack.c.b16 %v72, %v69
    %v76 = vpack.c.b16 %v73, %v70
    %vm77 = vcmask 97280
    %v79 = vsel %vm77, %v59, 0
    %vm81 = vcmask 1045504
    %v83 = vsel %vm81, %v74, 0
    %v86 = vsel %vm81, %v75, 0
    %v89 = vsel %vm81, %v76, 0
    %91 = vmatprep.subr.bf16.mxu0 %v86
    %92 = vmatpush1.bf16.msra.mxu0 %v83
    %93 = vmatprep.subr.bf16.mxu0 0
    %94 = vmatpush1.bf16.msra.mxu0 0
    %95 = vmatprep.subr.bf16.mxu0 0
    %96 = vmatpush1.bf16.msra.mxu0 0
    %97 = vmatprep.subr.bf16.mxu0 0
    %98 = vmatpush1.bf16.msra.mxu0 0
    %99 = vmatprep.subr.bf16.mxu0 0
    %100 = vmatpush1.bf16.msra.mxu0 0
    %101 = vmatprep.subr.bf16.mxu0 0
    %102 = vmatpush1.bf16.msra.mxu0 0
    %103 = vmatprep.subr.bf16.mxu0 0
    %104 = vmatpush1.bf16.msra.mxu0 0
    %105 = vmatprep.subr.bf16.mxu0 0
    %106 = vmatpush1.bf16.msra.mxu0 0
    %107 = vmatprep.subr.bf16.mxu0 0
    %108 = vmatpush1.bf16.msra.mxu0 0
    %109 = vmatprep.subr.bf16.mxu0 0
    %110 = vmatpush1.bf16.msra.mxu0 0
    %111 = vmatprep.subr.bf16.mxu0 0
    %112 = vmatpush1.bf16.msra.mxu0 0
    %113 = vmatprep.subr.bf16.mxu0 0
    %114 = vmatpush1.bf16.msra.mxu0 0
    %115 = vmatprep.subr.bf16.mxu0 0
    %116 = vmatpush1.bf16.msra.mxu0 0
    %117 = vmatprep.subr.bf16.mxu0 0
    %118 = vmatpush1.bf16.msra.mxu0 0
    %119 = vmatprep.subr.bf16.mxu0 0
    %120 = vmatpush1.bf16.msra.mxu0 0
    %121 = vmatprep.subr.bf16.mxu0 0
    %122 = vmatpush1.bf16.msra.mxu0 0
    %123 = vmatprep.mubr.bf16.mxu0 0
    %124 = vmatmul.mubr.bf16.gmra.mrb[0].mxu0 %v79
    %v125 = vpop.f32.mrb[0].mxu0
    %v126 = vadd.f32 0.0, %v125
    %v127 = vpop.f32.mrb[0].mxu0
    %v128 = vadd.f32 0.0, %v127
    %v129 = vpop.f32.mrb[0].mxu0
    %v130 = vpop.f32.mrb[0].mxu0
    %131 = vdwg.mxu0
    %132 = vmatprep.subr.bf16.mxu0 0
    %133 = vmatpush1.bf16.msra.mxu0 %v89
    %134 = vmatprep.subr.bf16.mxu0 0
    %135 = vmatpush1.bf16.msra.mxu0 0
    %136 = vmatprep.subr.bf16.mxu0 0
    %137 = vmatpush1.bf16.msra.mxu0 0
    %138 = vmatprep.subr.bf16.mxu0 0
    %139 = vmatpush1.bf16.msra.mxu0 0
    %140 = vmatprep.subr.bf16.mxu0 0
    %141 = vmatpush1.bf16.msra.mxu0 0
    %142 = vmatprep.subr.bf16.mxu0 0
    %143 = vmatpush1.bf16.msra.mxu0 0
    %144 = vmatprep.subr.bf16.mxu0 0
    %145 = vmatpush1.bf16.msra.mxu0 0
    %146 = vmatprep.subr.bf16.mxu0 0
    %147 = vmatpush1.bf16.msra.mxu0 0
    %148 = vmatprep.subr.bf16.mxu0 0
    %149 = vmatpush1.bf16.msra.mxu0 0
    %150 = vmatprep.subr.bf16.mxu0 0
    %151 = vmatpush1.bf16.msra.mxu0 0
    %152 = vmatprep.subr.bf16.mxu0 0
    %153 = vmatpush1.bf16.msra.mxu0 0
    %154 = vmatprep.subr.bf16.mxu0 0
    %155 = vmatpush1.bf16.msra.mxu0 0
    %156 = vmatprep.subr.bf16.mxu0 0
    %157 = vmatpush1.bf16.msra.mxu0 0
    %158 = vmatprep.subr.bf16.mxu0 0
    %159 = vmatpush1.bf16.msra.mxu0 0
    %160 = vmatprep.subr.bf16.mxu0 0
    %161 = vmatpush1.bf16.msra.mxu0 0
    %162 = vmatprep.subr.bf16.mxu0 0
    %163 = vmatpush1.bf16.msra.mxu0 0
    %164 = vmatprep.mubr.bf16.mxu0 0
    %165 = vmatmul.mubr.bf16.gmra.mrb[0].mxu0 %v79
    %v166 = vpop.f32.mrb[0].mxu0
    %v167 = vadd.f32 0.0, %v166
    %v168 = vpop.f32.mrb[0].mxu0
    %v169 = vpop.f32.mrb[0].mxu0
    %v170 = vpop.f32.mrb[0].mxu0
    %171 = vdwg.mxu0
    %v172 = vld [vmem:[%s4] sm:$0x1]
    %v173 = vld [vmem:[%s4 + $0x1] sm:$0x1]
    %v174 = vld [vmem:[%s4 + $0x2] sm:$0x1]
    %v175 = vld [vmem:[%s4 + $0x3] sm:$0x1]
    %v176 = vlaneseq
    %v177 = vshrl.u32 %v176, 7
    %v178 = vsub.s32 0, %v177
    %v179 = vrot.slane %v172, %v178
    %v180 = vadd.f32 %v126, %v179
    %v181 = vxor.u32 %v180, 2147483648
    %v182 = vmul.f32 %v181, 1.442695
    %v183 = vpow.pop %v182
    %v184 = vadd.f32 %v183, 1.0
    %v185 = vrcp.pop %v184
    %v186 = vmul.f32 1.0, %v185
    %v187 = vlaneseq
    %v188 = vshrl.u32 %v187, 7
    %v189 = vsub.s32 0, %v188
    %v190 = vrot.slane %v173, %v189
    %v191 = vadd.f32 %v128, %v190
    %v192 = vxor.u32 %v191, 2147483648
    %v193 = vmul.f32 %v192, 1.442695
    %v194 = vpow.pop %v193
    %v195 = vadd.f32 %v194, 1.0
    %v196 = vrcp.pop %v195
    %v197 = vmul.f32 1.0, %v196
    %v198 = vlaneseq
    %v199 = vshrl.u32 %v198, 7
    %v200 = vsub.s32 0, %v199
    %v201 = vrot.slane %v174, %v200
    %v202 = vadd.f32 %v167, %v201
    %v203 = vlaneseq
    %v204 = vshrl.u32 %v203, 7
    %v205 = vsub.s32 0, %v204
    %v206 = vrot.slane %v175, %v205
    %v207 = vmul.f32 %v186, %v206
    %v208 = vadd.f32 %v202, %v207
    %v209 = vtanh.pop %v208
    %v210 = vsub.f32 1.0, %v197
    %v211 = vmul.f32 %v210, %v209
    %v212 = vld [vmem:[%s2] sm:$0xf]
    %v213 = vpack.c.bf16 %v211, %v211
    %214 = vmatprep.subr.bf16.mxu0 0
    %215 = vmatpush1.bf16.xpose.msra.mxu0 %v213
    %216 = vmatprep.subr.bf16.mxu0 0
    %217 = vmatpush1.bf16.xpose.msra.mxu0 0
    %218 = vmatprep.subr.bf16.mxu0 0
    %219 = vmatpush1.bf16.xpose.msra.mxu0 0
    %220 = vmatprep.subr.bf16.mxu0 0
    %221 = vmatpush1.bf16.xpose.msra.mxu0 0
    %222 = vmatprep.subr.bf16.mxu0 0
    %223 = vmatpush1.bf16.xpose.msra.mxu0 0
    %224 = vmatprep.subr.bf16.mxu0 0
    %225 = vmatpush1.bf16.xpose.msra.mxu0 0
    %226 = vmatprep.subr.bf16.mxu0 0
    %227 = vmatpush1.bf16.xpose.msra.mxu0 0
    %228 = vmatprep.subr.bf16.mxu0 0
    %229 = vmatpush1.bf16.xpose.msra.mxu0 0
    %230 = vmatprep.subr.bf16.mxu0 0
    %231 = vmatpush1.bf16.xpose.msra.mxu0 0
    %232 = vmatprep.subr.bf16.mxu0 0
    %233 = vmatpush1.bf16.xpose.msra.mxu0 0
    %234 = vmatprep.subr.bf16.mxu0 0
    %235 = vmatpush1.bf16.xpose.msra.mxu0 0
    %236 = vmatprep.subr.bf16.mxu0 0
    %237 = vmatpush1.bf16.xpose.msra.mxu0 0
    %238 = vmatprep.subr.bf16.mxu0 0
    %239 = vmatpush1.bf16.xpose.msra.mxu0 0
    %240 = vmatprep.subr.bf16.mxu0 0
    %241 = vmatpush1.bf16.xpose.msra.mxu0 0
    %242 = vmatprep.subr.bf16.mxu0 0
    %243 = vmatpush1.bf16.xpose.msra.mxu0 0
    %244 = vmatprep.subr.bf16.mxu0 0
    %245 = vmatpush1.bf16.xpose.msra.mxu0 0
    %246 = vmatprep.mubr.bf16.mxu0 0
    %247 = vmatmul.mubr.bf16.gmra.mrb[0].mxu0 %v212
    %v248 = vpop.f32.mrb[0].mxu0
    %v249 = vadd.f32 0.0, %v248
    %v250 = vpop.f32.mrb[0].mxu0
    %v251 = vpop.f32.mrb[0].mxu0
    %v252 = vpop.f32.mrb[0].mxu0
    %253 = vdwg.mxu0
    %v254 = vld [vmem:[#allocation7] sm:$0xf]
    %v256 = vsel %vm77, %v254, 0
    %258 = vmatprep.subr.bf16.mxu0 0
    %259 = vmatpush1.bf16.xpose.msra.mxu0 %v79
    %260 = vmatprep.subr.bf16.mxu0 0
    %261 = vmatpush1.bf16.xpose.msra.mxu0 0
    %262 = vmatprep.subr.bf16.mxu0 0
    %263 = vmatpush1.bf16.xpose.msra.mxu0 0
    %264 = vmatprep.subr.bf16.mxu0 0
    %265 = vmatpush1.bf16.xpose.msra.mxu0 0
    %266 = vmatprep.subr.bf16.mxu0 0
    %267 = vmatpush1.bf16.xpose.msra.mxu0 0
    %268 = vmatprep.subr.bf16.mxu0 0
    %269 = vmatpush1.bf16.xpose.msra.mxu0 0
    %270 = vmatprep.subr.bf16.mxu0 0
    %271 = vmatpush1.bf16.xpose.msra.mxu0 0
    %272 = vmatprep.subr.bf16.mxu0 0
    %273 = vmatpush1.bf16.xpose.msra.mxu0 0
    %274 = vmatprep.subr.bf16.mxu0 0
    %275 = vmatpush1.bf16.xpose.msra.mxu0 0
    %276 = vmatprep.subr.bf16.mxu0 0
    %277 = vmatpush1.bf16.xpose.msra.mxu0 0
    %278 = vmatprep.subr.bf16.mxu0 0
    %279 = vmatpush1.bf16.xpose.msra.mxu0 0
    %280 = vmatprep.subr.bf16.mxu0 0
    %281 = vmatpush1.bf16.xpose.msra.mxu0 0
    %282 = vmatprep.subr.bf16.mxu0 0
    %283 = vmatpush1.bf16.xpose.msra.mxu0 0
    %284 = vmatprep.subr.bf16.mxu0 0
    %285 = vmatpush1.bf16.xpose.msra.mxu0 0
    %286 = vmatprep.subr.bf16.mxu0 0
    %287 = vmatpush1.bf16.xpose.msra.mxu0 0
    %288 = vmatprep.subr.bf16.mxu0 0
    %289 = vmatpush1.bf16.xpose.msra.mxu0 0
    %290 = vmatprep.mubr.bf16.mxu0 0
    %291 = vmatmul.mubr.bf16.gmra.mrb[0].mxu0 %v256
    %v292 = vpop.f32.mrb[0].mxu0
    %v293 = vadd.f32 0.0, %v292
    %v294 = vpop.f32.mrb[0].mxu0
    %v295 = vpop.f32.mrb[0].mxu0
    %v296 = vpop.f32.mrb[0].mxu0
    %297 = vdwg.mxu0
    %v298 = vadd.f32 %v249, %v293
    %v299 = vld [vmem:[%s4 + $0x4] sm:$0x1]
    %301 = vset.pattern.permute.xlu0 0
    %302 = vperm.xlu0 %301, %v299
    %v303 = vpop.permute.xlu0 %302
    %v305 = vadd.f32 %v298, %v303
    %vm306 = vcmask 57344
    %307 = vst.msk [vmem:[#allocation8] sm:$0x1] %vm306, %v305
    // Predicated region
    $region34: #{tpu_custom_call.1} parent=1 // pred_check
      _
    $region35: #{tpu_custom_call.1} parent=1 // pred_check_branch
      %309 = sbr.rel (0) target = $region37
    $region36: #{tpu_custom_call.1} parent=1 // pred_region
      %s311 = ssub.s32 16, 16
      %312 = vsyncadd [#allocation4], %s311
      %s314 = sshll.u32 [#allocation8], 4
      %s315 = int_to_ptr.vmem [resolvable:$true] %s314
      %317 = dma.vmem_to_hbm [thread:$0]  %s315, 16, %s5, [#allocation4]
    $region37: #{tpu_custom_call.1} parent=1 // pred_fallthru
      _
    // Predicated region
    $region38: #{tpu_custom_call.1} parent=1 // pred_check
      _
    $region39: #{tpu_custom_call.1} parent=1 // pred_check_branch
      %319 = sbr.rel (0) target = $region41
    $region40: #{tpu_custom_call.1} parent=1 // pred_region
      %320 = dma.done [#allocation4], 16
    $region41: #{tpu_custom_call.1} parent=1 // pred_fallthru
      _
    %321 = vsyncpa [#allocation3], 1
    %322 = vsyncpa [#allocation6], 1
    %323 = vsyncpa [#allocation4], 1

</llo_original>
